<compile_context>
chip_gen: v7x
topology: tpu7x:2x2x1
jax: 0.10.0
libtpu: 0.0.40
codegen_flags: <defaults>
</compile_context>

<pallas_src>
import jax
import jax.numpy as jnp
from jax import lax
from jax.experimental import pallas as pl
from jax.experimental.pallas import tpu as pltpu


LAYER_NORM_EPS = 1e-12  # config.layer_norm_eps (transformers default)


def _gelu_exact(x):
    # matches transformers' erf-based gelu used by the reference module
    return 0.5 * x * (1.0 + lax.erf(x * (1.0 / jnp.sqrt(2.0).astype(x.dtype))))


def _round_up(n, m):
    return ((n + m - 1) // m) * m


def _vmem_cap_bytes():
    """Generation-aware VMEM request cap with headroom for internal scratch."""
    try:
        cap = int(pltpu.get_tpu_info().vmem_capacity_bytes)
    except Exception:  # query unavailable (e.g. interpret mode) -> conservative
        cap = 64 * 1024 * 1024
    return max(int(cap * 0.85), 16 * 1024 * 1024)


def sslhead_kernel(x_ref, w1_ref, vecs_ref, wh_ref, bh_ref, out_ref):
    """Fused: x @ W1 + b1 -> erf-gelu -> LayerNorm -> @ W_heads + b_heads.

    x_ref   : (tm, H)      bf16  token tile (streamed)
    w1_ref  : (H, H)       bf16  dense weight (resident, single-buffered)
    vecs_ref: (3, H)       f32   rows = [dense_bias, ln_weight, ln_bias]
    wh_ref  : (H, n_pad)   bf16  concatenated (lane-padded) head weights
    bh_ref  : (1, n_pad)   f32   concatenated (lane-padded) head biases
    out_ref : (tm, n_pad)  f32   concatenated logits
    """
    b1 = vecs_ref[0:1, :]
    ln_w = vecs_ref[1:2, :]
    ln_b = vecs_ref[2:3, :]

    # dense: bf16 operands, f32 accumulation on the MXU
    h = jnp.dot(x_ref[...], w1_ref[...], preferred_element_type=jnp.float32)
    h = h + b1

    # gelu (exact, erf-based) in f32
    h = _gelu_exact(h)

    # layer norm over the hidden axis in f32
    mean = jnp.mean(h, axis=-1, keepdims=True)
    centered = h - mean
    var = jnp.mean(centered * centered, axis=-1, keepdims=True)
    h_ln = centered * lax.rsqrt(var + LAYER_NORM_EPS)
    h_ln = h_ln * ln_w + ln_b

    # all heads as one lane-dense concatenated projection
    logits = jnp.dot(h_ln.astype(jnp.bfloat16), wh_ref[...],
                     preferred_element_type=jnp.float32)
    out_ref[...] = (logits + bh_ref[...]).astype(out_ref.dtype)


def sslhead_forward(features, params, layer_names, layer_num_labels, *, tm=512):
    """features: [B, S, H] float32 -> dict of logits per head, each [B, S, n_k]."""
    B, S, H = features.shape
    T = B * S
    n_total = int(sum(layer_num_labels))

    # pad concatenated head output to a 128-lane multiple -> unmasked stores
    n_pad = _round_up(max(n_total, 128), 128)

    # balanced token tiling: split T into n_tiles roughly-equal, 8-aligned
    # tiles (avoids ~2x last-tile waste of round_up(T, tm)); force >= 2 grid
    # steps when T is big enough so double-buffering overlaps / megacore works.
    n_tiles = pl.cdiv(T, tm)
    if n_tiles < 2 and T >= 256:
        n_tiles = 2
    tm_eff = _round_up(pl.cdiv(T, n_tiles), 8)
    t_pad = n_tiles * tm_eff

    # stream x as bf16; cast before the pad so the (tiny) pad pass is bf16 too
    x2d = features.reshape(T, H).astype(jnp.bfloat16)
    if t_pad != T:
        x2d = jnp.pad(x2d, ((0, t_pad - T), (0, 0)))

    # parameters: bf16 matmul operands, lane-padded head weight/bias,
    # fused (3, H) vector block for dense bias / LN params.
    w1 = params["dense_w"].astype(jnp.bfloat16)                        # (H, H)
    wh = jnp.pad(params["heads_w"],
                 ((0, 0), (0, n_pad - n_total))).astype(jnp.bfloat16)  # (H, n_pad)
    bh = jnp.pad(params["heads_b"], ((0, 0), (0, n_pad - n_total)))    # (1, n_pad)
    vecs = jnp.concatenate(
        [params["dense_b"], params["ln_w"], params["ln_b"]], axis=0)   # (3, H)

    # advisory cost estimate for the XLA scheduler
    flops = 2 * t_pad * H * H + 2 * t_pad * H * n_pad
    bytes_accessed = (x2d.size * 2 + w1.size * 2 + wh.size * 2
                      + vecs.size * 4 + bh.size * 4 + t_pad * n_pad * 4)
    cost = pl.CostEstimate(flops=int(flops),
                           transcendentals=int(t_pad * H),
                           bytes_accessed=int(bytes_accessed))

    # VMEM budget: double-buffered x/out tiles, single-buffered resident
    # weights/vectors, plus the f32 gelu/LN temporaries; cap generation-aware.
    vmem_needed = (2 * tm_eff * H * 2          # x tiles (bf16, double-buffered)
                   + 2 * tm_eff * n_pad * 4    # out tiles (f32, double-buffered)
                   + H * H * 2                 # dense weight (single-buffered)
                   + H * n_pad * 2             # head weights (single-buffered)
                   + 3 * H * 4 + n_pad * 4     # bias / LN vectors
                   + 3 * tm_eff * H * 4)       # f32 intermediates (gelu/LN)
    vmem_limit = int(min(max(vmem_needed + (8 << 20), 32 << 20),
                         _vmem_cap_bytes()))

    def _build(single_buffer_invariants):
        inv = ({"pipeline_mode": pl.Buffered(1)}
               if single_buffer_invariants else {})
        in_specs = [
            pl.BlockSpec((tm_eff, H), lambda i: (i, 0)),            # x tile
            pl.BlockSpec((H, H), lambda i: (0, 0), **inv),          # dense weight
            pl.BlockSpec((3, H), lambda i: (0, 0), **inv),          # [b1; ln_w; ln_b]
            pl.BlockSpec((H, n_pad), lambda i: (0, 0), **inv),      # heads weight
            pl.BlockSpec((1, n_pad), lambda i: (0, 0), **inv),      # heads bias
        ]
        return pl.pallas_call(
            sslhead_kernel,
            out_shape=jax.ShapeDtypeStruct((t_pad, n_pad), jnp.float32),
            grid_spec=pltpu.PrefetchScalarGridSpec(
                num_scalar_prefetch=0,
                grid=(n_tiles,),
                in_specs=in_specs,
                out_specs=pl.BlockSpec((tm_eff, n_pad), lambda i: (i, 0)),
            ),
            compiler_params=pltpu.CompilerParams(
                dimension_semantics=("parallel",),
                vmem_limit_bytes=vmem_limit),
            cost_estimate=cost,
        )

    try:
        out = _build(True)(x2d, w1, vecs, wh, bh)
    except Exception:
        # pipeline_mode=pl.Buffered(1) not supported on this jax version:
        # fall back to default (double) buffering of the invariant operands.
        out = _build(False)(x2d, w1, vecs, wh, bh)

    # drop token padding and lane padding, split back per head
    out = out[:T, :n_total]
    logits, off = {}, 0
    for name, n in zip(layer_names, layer_num_labels):
        logits[name] = out[:, off:off + n].reshape(B, S, n)
        off += n
    return logits


def init_params(key, hidden_size, layer_num_labels):
    n_total = int(sum(layer_num_labels))
    ks = jax.random.split(key, 4)
    scale = 0.02
    return {
        "dense_w": scale * jax.random.normal(ks[0], (hidden_size, hidden_size), jnp.float32),
        "dense_b": scale * jax.random.normal(ks[1], (1, hidden_size), jnp.float32),
        "ln_w": jnp.ones((1, hidden_size), jnp.float32),
        "ln_b": jnp.zeros((1, hidden_size), jnp.float32),
        "heads_w": scale * jax.random.normal(ks[2], (hidden_size, n_total), jnp.float32),
        "heads_b": scale * jax.random.normal(ks[3], (1, n_total), jnp.float32),
    }


def sslhead_reference(features, params, layer_names, layer_num_labels):
    """Plain-JAX reference mirroring the kernel's bf16-matmul / f32-elementwise mix."""
    B, S, H = features.shape
    x = features.reshape(B * S, H)
    h = jnp.dot(x.astype(jnp.bfloat16), params["dense_w"].astype(jnp.bfloat16),
                preferred_element_type=jnp.float32) + params["dense_b"]
    h = _gelu_exact(h)
    mean = jnp.mean(h, axis=-1, keepdims=True)
    centered = h - mean
    var = jnp.mean(centered * centered, axis=-1, keepdims=True)
    h = centered * lax.rsqrt(var + LAYER_NORM_EPS)
    h = h * params["ln_w"] + params["ln_b"]
    out = jnp.dot(h.astype(jnp.bfloat16), params["heads_w"].astype(jnp.bfloat16),
                  preferred_element_type=jnp.float32) + params["heads_b"]
    logits, off = {}, 0
    for name, n in zip(layer_names, layer_num_labels):
        logits[name] = out[:, off:off + n].reshape(B, S, n)
        off += n
    return logits


if __name__ == "__main__":
    B, S, H = 2, 8, 32
    layer_names = ["is_positive", "exponent", "fraction_bin"]
    layer_num_labels = [2, 10, 4]

    key = jax.random.PRNGKey(0)
    k_feat, k_param = jax.random.split(key)
    features = jax.random.normal(k_feat, (B, S, H), jnp.float32)
    params = init_params(k_param, H, layer_num_labels)

    logits = sslhead_forward(features, params, layer_names, layer_num_labels)
    logits = jax.tree_util.tree_map(jax.block_until_ready, logits)

    ref = sslhead_reference(features, params, layer_names, layer_num_labels)
    nmap = dict(zip(layer_names, layer_num_labels))
    for name in layer_names:
        assert logits[name].shape == (B, S, nmap[name])
        err = float(jnp.max(jnp.abs(logits[name] - ref[name])))
        assert err < 2e-3, f"{name} mismatch: {err}"

    print("KERNEL_OK")
</pallas_src>

<mosaic_0001>
module attributes {stable_mosaic.version = 11 : i64} {
  func.func @sslhead_kernel(%arg0: i32, %arg1: memref<16x32xbf16, #tpu.memory_space<vmem>>, %arg2: memref<32x32xbf16, #tpu.memory_space<vmem>>, %arg3: memref<3x32xf32, #tpu.memory_space<vmem>>, %arg4: memref<32x128xbf16, #tpu.memory_space<vmem>>, %arg5: memref<1x128xf32, #tpu.memory_space<vmem>>, %arg6: memref<16x128xf32, #tpu.memory_space<vmem>>) attributes {dimension_semantics = [#tpu.dimension_semantics<parallel>], iteration_bounds = array<i64: 1>, scalar_prefetch = 0 : i64, scratch_operands = 0 : i64, tpu.core_type = #tpu.core_type<tc>, window_params = [{transform_indices = @transform_0, window_bounds = array<i64: 16, 32>}, {pipeline_mode = #tpu.pipeline_mode<synchronous>, transform_indices = @transform_1, window_bounds = array<i64: 32, 32>}, {pipeline_mode = #tpu.pipeline_mode<synchronous>, transform_indices = @transform_2, window_bounds = array<i64: 3, 32>}, {pipeline_mode = #tpu.pipeline_mode<synchronous>, transform_indices = @transform_3, window_bounds = array<i64: 32, 128>}, {pipeline_mode = #tpu.pipeline_mode<synchronous>, transform_indices = @transform_4, window_bounds = array<i64: 1, 128>}, {transform_indices = @transform_5, window_bounds = array<i64: 16, 128>}]} {
    %c0 = arith.constant 0 : index
    %c0_0 = arith.constant 0 : index
    %0 = vector.load %arg3[%c0, %c0_0] : memref<3x32xf32, #tpu.memory_space<vmem>>, vector<1x32xf32>
    %c1 = arith.constant 1 : index
    %c0_1 = arith.constant 0 : index
    %1 = vector.load %arg3[%c1, %c0_1] : memref<3x32xf32, #tpu.memory_space<vmem>>, vector<1x32xf32>
    %c2 = arith.constant 2 : index
    %c0_2 = arith.constant 0 : index
    %2 = vector.load %arg3[%c2, %c0_2] : memref<3x32xf32, #tpu.memory_space<vmem>>, vector<1x32xf32>
    %c0_3 = arith.constant 0 : index
    %c0_4 = arith.constant 0 : index
    %3 = vector.load %arg1[%c0_3, %c0_4] : memref<16x32xbf16, #tpu.memory_space<vmem>>, vector<16x32xbf16>
    %c0_5 = arith.constant 0 : index
    %c0_6 = arith.constant 0 : index
    %4 = vector.load %arg2[%c0_5, %c0_6] : memref<32x32xbf16, #tpu.memory_space<vmem>>, vector<32x32xbf16>
    %cst = arith.constant dense<0.000000e+00> : vector<16x32xf32>
    %5 = tpu.matmul %3, %4, %cst {dimension_numbers = #tpu.dot_dimension_numbers<[1], [0], [0], [1], [0, 0, 1, 1], [], []>} : vector<16x32xbf16>, vector<32x32xbf16>, vector<16x32xf32> -> vector<16x32xf32>
    %6 = vector.broadcast %0 : vector<1x32xf32> to vector<16x32xf32>
    %7 = arith.addf %5, %6 : vector<16x32xf32>
    %cst_7 = arith.constant 5.000000e-01 : f32
    %8 = vector.broadcast %cst_7 : f32 to vector<16x32xf32>
    %9 = arith.mulf %8, %7 : vector<16x32xf32>
    %cst_8 = arith.constant 2.000000e+00 : f32
    %10 = math.sqrt %cst_8 : f32
    %cst_9 = arith.constant 1.000000e+00 : f32
    %11 = arith.divf %cst_9, %10 : f32
    %12 = vector.broadcast %11 : f32 to vector<16x32xf32>
    %13 = arith.mulf %7, %12 : vector<16x32xf32>
    %14 = math.erf %13 : vector<16x32xf32>
    %cst_10 = arith.constant 1.000000e+00 : f32
    %15 = vector.broadcast %cst_10 : f32 to vector<16x32xf32>
    %16 = arith.addf %15, %14 : vector<16x32xf32>
    %17 = arith.mulf %9, %16 : vector<16x32xf32>
    %cst_11 = arith.constant dense<0.000000e+00> : vector<16xf32>
    %18 = vector.multi_reduction <add>, %17, %cst_11 [1] : vector<16x32xf32> to vector<16xf32>
    %19 = vector.shape_cast %18 : vector<16xf32> to vector<16x1xf32>
    %cst_12 = arith.constant 3.200000e+01 : f32
    %20 = vector.broadcast %cst_12 : f32 to vector<16x1xf32>
    %21 = arith.divf %19, %20 : vector<16x1xf32>
    %22 = vector.broadcast %21 : vector<16x1xf32> to vector<16x32xf32>
    %23 = arith.subf %17, %22 : vector<16x32xf32>
    %24 = arith.mulf %23, %23 : vector<16x32xf32>
    %cst_13 = arith.constant dense<0.000000e+00> : vector<16xf32>
    %25 = vector.multi_reduction <add>, %24, %cst_13 [1] : vector<16x32xf32> to vector<16xf32>
    %26 = vector.shape_cast %25 : vector<16xf32> to vector<16x1xf32>
    %cst_14 = arith.constant 3.200000e+01 : f32
    %27 = vector.broadcast %cst_14 : f32 to vector<16x1xf32>
    %28 = arith.divf %26, %27 : vector<16x1xf32>
    %cst_15 = arith.constant 9.99999996E-13 : f32
    %29 = vector.broadcast %cst_15 : f32 to vector<16x1xf32>
    %30 = arith.addf %28, %29 : vector<16x1xf32>
    %31 = math.rsqrt %30 : vector<16x1xf32>
    %32 = vector.broadcast %31 : vector<16x1xf32> to vector<16x32xf32>
    %33 = arith.mulf %23, %32 : vector<16x32xf32>
    %34 = vector.broadcast %1 : vector<1x32xf32> to vector<16x32xf32>
    %35 = arith.mulf %33, %34 : vector<16x32xf32>
    %36 = vector.broadcast %2 : vector<1x32xf32> to vector<16x32xf32>
    %37 = arith.addf %35, %36 : vector<16x32xf32>
    %38 = arith.truncf %37 : vector<16x32xf32> to vector<16x32xbf16>
    %c0_16 = arith.constant 0 : index
    %c0_17 = arith.constant 0 : index
    %39 = vector.load %arg4[%c0_16, %c0_17] : memref<32x128xbf16, #tpu.memory_space<vmem>>, vector<32x128xbf16>
    %cst_18 = arith.constant dense<0.000000e+00> : vector<16x128xf32>
    %40 = tpu.matmul %38, %39, %cst_18 {dimension_numbers = #tpu.dot_dimension_numbers<[1], [0], [0], [1], [0, 0, 1, 1], [], []>} : vector<16x32xbf16>, vector<32x128xbf16>, vector<16x128xf32> -> vector<16x128xf32>
    %c0_19 = arith.constant 0 : index
    %c0_20 = arith.constant 0 : index
    %41 = vector.load %arg5[%c0_19, %c0_20] : memref<1x128xf32, #tpu.memory_space<vmem>>, vector<1x128xf32>
    %42 = vector.broadcast %41 : vector<1x128xf32> to vector<16x128xf32>
    %43 = arith.addf %40, %42 : vector<16x128xf32>
    %c0_21 = arith.constant 0 : index
    %c0_22 = arith.constant 0 : index
    %44 = vector.load %arg6[%c0_21, %c0_22] : memref<16x128xf32, #tpu.memory_space<vmem>>, vector<16x128xf32>
    tpu.vector_store %arg6[%c0_21, %c0_22], %43 {strides = array<i32>} : memref<16x128xf32, #tpu.memory_space<vmem>>, vector<16x128xf32>,
    return
  }
  func.func @transform_0(%arg0: i32) -> (i32, i32) {
    %c0_i32 = arith.constant 0 : i32
    %c0_i32_0 = arith.constant 0 : i32
    return %arg0, %c0_i32 : i32, i32
  }
  func.func @transform_1(%arg0: i32) -> (i32, i32) {
    %c0_i32 = arith.constant 0 : i32
    %c0_i32_0 = arith.constant 0 : i32
    %c0_i32_1 = arith.constant 0 : i32
    return %c0_i32, %c0_i32_0 : i32, i32
  }
  func.func @transform_2(%arg0: i32) -> (i32, i32) {
    %c0_i32 = arith.constant 0 : i32
    %c0_i32_0 = arith.constant 0 : i32
    %c0_i32_1 = arith.constant 0 : i32
    return %c0_i32, %c0_i32_0 : i32, i32
  }
  func.func @transform_3(%arg0: i32) -> (i32, i32) {
    %c0_i32 = arith.constant 0 : i32
    %c0_i32_0 = arith.constant 0 : i32
    %c0_i32_1 = arith.constant 0 : i32
    return %c0_i32, %c0_i32_0 : i32, i32
  }
  func.func @transform_4(%arg0: i32) -> (i32, i32) {
    %c0_i32 = arith.constant 0 : i32
    %c0_i32_0 = arith.constant 0 : i32
    %c0_i32_1 = arith.constant 0 : i32
    return %c0_i32, %c0_i32_0 : i32, i32
  }
  func.func @transform_5(%arg0: i32) -> (i32, i32) {
    %c0_i32 = arith.constant 0 : i32
    %c0_i32_0 = arith.constant 0 : i32
    return %arg0, %c0_i32 : i32, i32
  }
}

module attributes {stable_mosaic.version = 11 : i64} {
  func.func @sslhead_kernel(%arg0: i32, %arg1: memref<16x32xbf16, #tpu.memory_space<vmem>>, %arg2: memref<32x32xbf16, #tpu.memory_space<vmem>>, %arg3: memref<3x32xf32, #tpu.memory_space<vmem>>, %arg4: memref<32x128xbf16, #tpu.memory_space<vmem>>, %arg5: memref<1x128xf32, #tpu.memory_space<vmem>>, %arg6: memref<16x128xf32, #tpu.memory_space<vmem>>) attributes {dimension_semantics = [#tpu.dimension_semantics<parallel>], iteration_bounds = array<i64: 1>, scalar_prefetch = 0 : i64, scratch_operands = 0 : i64, tpu.core_type = #tpu.core_type<tc>, window_params = [{transform_indices = @transform_0, window_bounds = array<i64: 16, 32>}, {pipeline_mode = #tpu.pipeline_mode<synchronous>, transform_indices = @transform_1, window_bounds = array<i64: 32, 32>}, {pipeline_mode = #tpu.pipeline_mode<synchronous>, transform_indices = @transform_2, window_bounds = array<i64: 3, 32>}, {pipeline_mode = #tpu.pipeline_mode<synchronous>, transform_indices = @transform_3, window_bounds = array<i64: 32, 128>}, {pipeline_mode = #tpu.pipeline_mode<synchronous>, transform_indices = @transform_4, window_bounds = array<i64: 1, 128>}, {transform_indices = @transform_5, window_bounds = array<i64: 16, 128>}]} {
    %c0 = arith.constant 0 : index
    %c0_0 = arith.constant 0 : index
    %0 = vector.load %arg3[%c0, %c0_0] : memref<3x32xf32, #tpu.memory_space<vmem>>, vector<1x32xf32>
    %c1 = arith.constant 1 : index
    %c0_1 = arith.constant 0 : index
    %1 = vector.load %arg3[%c1, %c0_1] : memref<3x32xf32, #tpu.memory_space<vmem>>, vector<1x32xf32>
    %c2 = arith.constant 2 : index
    %c0_2 = arith.constant 0 : index
    %2 = vector.load %arg3[%c2, %c0_2] : memref<3x32xf32, #tpu.memory_space<vmem>>, vector<1x32xf32>
    %c0_3 = arith.constant 0 : index
    %c0_4 = arith.constant 0 : index
    %3 = vector.load %arg1[%c0_3, %c0_4] : memref<16x32xbf16, #tpu.memory_space<vmem>>, vector<16x32xbf16>
    %c0_5 = arith.constant 0 : index
    %c0_6 = arith.constant 0 : index
    %4 = vector.load %arg2[%c0_5, %c0_6] : memref<32x32xbf16, #tpu.memory_space<vmem>>, vector<32x32xbf16>
    %cst = arith.constant dense<0.000000e+00> : vector<16x32xf32>
    %5 = tpu.matmul %3, %4, %cst {dimension_numbers = #tpu.dot_dimension_numbers<[1], [0], [0], [1], [0, 0, 1, 1], [], []>} : vector<16x32xbf16>, vector<32x32xbf16>, vector<16x32xf32> -> vector<16x32xf32>
    %6 = vector.broadcast %0 : vector<1x32xf32> to vector<16x32xf32>
    %7 = arith.addf %5, %6 : vector<16x32xf32>
    %cst_7 = arith.constant 5.000000e-01 : f32
    %8 = vector.broadcast %cst_7 : f32 to vector<16x32xf32>
    %9 = arith.mulf %8, %7 : vector<16x32xf32>
    %cst_8 = arith.constant 2.000000e+00 : f32
    %10 = math.sqrt %cst_8 : f32
    %cst_9 = arith.constant 1.000000e+00 : f32
    %11 = arith.divf %cst_9, %10 : f32
    %12 = vector.broadcast %11 : f32 to vector<16x32xf32>
    %13 = arith.mulf %7, %12 : vector<16x32xf32>
    %14 = math.erf %13 : vector<16x32xf32>
    %cst_10 = arith.constant 1.000000e+00 : f32
    %15 = vector.broadcast %cst_10 : f32 to vector<16x32xf32>
    %16 = arith.addf %15, %14 : vector<16x32xf32>
    %17 = arith.mulf %9, %16 : vector<16x32xf32>
    %cst_11 = arith.constant dense<0.000000e+00> : vector<16xf32>
    %18 = vector.multi_reduction <add>, %17, %cst_11 [1] : vector<16x32xf32> to vector<16xf32>
    %19 = vector.shape_cast %18 : vector<16xf32> to vector<16x1xf32>
    %cst_12 = arith.constant 3.200000e+01 : f32
    %20 = vector.broadcast %cst_12 : f32 to vector<16x1xf32>
    %21 = arith.divf %19, %20 : vector<16x1xf32>
    %22 = vector.broadcast %21 : vector<16x1xf32> to vector<16x32xf32>
    %23 = arith.subf %17, %22 : vector<16x32xf32>
    %24 = arith.mulf %23, %23 : vector<16x32xf32>
    %cst_13 = arith.constant dense<0.000000e+00> : vector<16xf32>
    %25 = vector.multi_reduction <add>, %24, %cst_13 [1] : vector<16x32xf32> to vector<16xf32>
    %26 = vector.shape_cast %25 : vector<16xf32> to vector<16x1xf32>
    %cst_14 = arith.constant 3.200000e+01 : f32
    %27 = vector.broadcast %cst_14 : f32 to vector<16x1xf32>
    %28 = arith.divf %26, %27 : vector<16x1xf32>
    %cst_15 = arith.constant 9.99999996E-13 : f32
    %29 = vector.broadcast %cst_15 : f32 to vector<16x1xf32>
    %30 = arith.addf %28, %29 : vector<16x1xf32>
    %31 = math.rsqrt %30 : vector<16x1xf32>
    %32 = vector.broadcast %31 : vector<16x1xf32> to vector<16x32xf32>
    %33 = arith.mulf %23, %32 : vector<16x32xf32>
    %34 = vector.broadcast %1 : vector<1x32xf32> to vector<16x32xf32>
    %35 = arith.mulf %33, %34 : vector<16x32xf32>
    %36 = vector.broadcast %2 : vector<1x32xf32> to vector<16x32xf32>
    %37 = arith.addf %35, %36 : vector<16x32xf32>
    %38 = arith.truncf %37 : vector<16x32xf32> to vector<16x32xbf16>
    %c0_16 = arith.constant 0 : index
    %c0_17 = arith.constant 0 : index
    %39 = vector.load %arg4[%c0_16, %c0_17] : memref<32x128xbf16, #tpu.memory_space<vmem>>, vector<32x128xbf16>
    %cst_18 = arith.constant dense<0.000000e+00> : vector<16x128xf32>
    %40 = tpu.matmul %38, %39, %cst_18 {dimension_numbers = #tpu.dot_dimension_numbers<[1], [0], [0], [1], [0, 0, 1, 1], [], []>} : vector<16x32xbf16>, vector<32x128xbf16>, vector<16x128xf32> -> vector<16x128xf32>
    %c0_19 = arith.constant 0 : index
    %c0_20 = arith.constant 0 : index
    %41 = vector.load %arg5[%c0_19, %c0_20] : memref<1x128xf32, #tpu.memory_space<vmem>>, vector<1x128xf32>
    %42 = vector.broadcast %41 : vector<1x128xf32> to vector<16x128xf32>
    %43 = arith.addf %40, %42 : vector<16x128xf32>
    %c0_21 = arith.constant 0 : index
    %c0_22 = arith.constant 0 : index
    %44 = vector.load %arg6[%c0_21, %c0_22] : memref<16x128xf32, #tpu.memory_space<vmem>>, vector<16x128xf32>
    tpu.vector_store %arg6[%c0_21, %c0_22], %43 {strides = array<i32>} : memref<16x128xf32, #tpu.memory_space<vmem>>, vector<16x128xf32>,
    return
  }
  func.func @transform_0(%arg0: i32) -> (i32, i32) {
    %c0_i32 = arith.constant 0 : i32
    %c0_i32_0 = arith.constant 0 : i32
    return %arg0, %c0_i32 : i32, i32
  }
  func.func @transform_1(%arg0: i32) -> (i32, i32) {
    %c0_i32 = arith.constant 0 : i32
    %c0_i32_0 = arith.constant 0 : i32
    %c0_i32_1 = arith.constant 0 : i32
    return %c0_i32, %c0_i32_0 : i32, i32
  }
  func.func @transform_2(%arg0: i32) -> (i32, i32) {
    %c0_i32 = arith.constant 0 : i32
    %c0_i32_0 = arith.constant 0 : i32
    %c0_i32_1 = arith.constant 0 : i32
    return %c0_i32, %c0_i32_0 : i32, i32
  }
  func.func @transform_3(%arg0: i32) -> (i32, i32) {
    %c0_i32 = arith.constant 0 : i32
    %c0_i32_0 = arith.constant 0 : i32
    %c0_i32_1 = arith.constant 0 : i32
    return %c0_i32, %c0_i32_0 : i32, i32
  }
  func.func @transform_4(%arg0: i32) -> (i32, i32) {
    %c0_i32 = arith.constant 0 : i32
    %c0_i32_0 = arith.constant 0 : i32
    %c0_i32_1 = arith.constant 0 : i32
    return %c0_i32, %c0_i32_0 : i32, i32
  }
  func.func @transform_5(%arg0: i32) -> (i32, i32) {
    %c0_i32 = arith.constant 0 : i32
    %c0_i32_0 = arith.constant 0 : i32
    return %arg0, %c0_i32 : i32, i32
  }
}

</mosaic_0001>

<llo_original>
// kernel: tpu_custom_call.1
$region0: #{tpu_custom_call.1}
  #allocation0 [shape = 'u32[]', space=smem, size = 0x4, offset = 0x4, fixed_abs, tag = 'smem constant byte address 0x4 - core index']
  #allocation1 [shape = 'u32[144,128]{1,0:T(1,128)}', space=vmem, size = 0x12000, scoped, tag = 'internal scratch']
  %s0 = inlined_call_operand.hbm [shape: bf16[16,32], index: 0, kind: input, shape index: {}]
  %s1 = inlined_call_operand.hbm [shape: bf16[32,32], index: 1, kind: input, shape index: {}]
  %s2 = inlined_call_operand.vmem [shape: f32[3,32], index: 2, kind: input, shape index: {}]
  %s3 = inlined_call_operand.hbm [shape: bf16[32,128], index: 3, kind: input, shape index: {}]
  %s4 = inlined_call_operand.vmem [shape: f32[1,128], index: 4, kind: input, shape index: {}]
  %s5 = inlined_call_operand.hbm [shape: f32[16,128], index: 5, kind: output, shape index: {}]
  %s6 = sld [smem:[#allocation0]]
  $region42: #{tpu_custom_call.1} parent=0
    _
  %s8 = ssub.s32 1, %s6
  %s9 = scalar_select 0, %s8, %s6
  $region1: #{tpu_custom_call.1} parent=0
    #allocation2 [shape = 'u8[4096]{0}', space=vmem, size = 0x1000, scoped, tag = 'input window, operand 0, single buffered']
    #allocation3 [shape = 's32[1]{0}', space=sflag, size = 0x4, scoped, tag = 'scoped memory for tpu_custom_call.1']
    #allocation4 [shape = 's32[1]{0}', space=sflag, size = 0x4, scoped, tag = 'scoped memory for tpu_custom_call.1']
    #allocation5 [shape = 'u8[8192]{0}', space=vmem, size = 0x2000, scoped, tag = 'input window, operand 1, single buffered']
    #allocation6 [shape = 's32[1]{0}', space=sflag, size = 0x4, scoped, tag = 'scoped memory for tpu_custom_call.1']
    #allocation7 [shape = 'u8[8192]{0}', space=vmem, size = 0x2000, scoped, tag = 'input window, operand 3, single buffered']
    #allocation8 [shape = 'u8[8192]{0}', space=vmem, size = 0x2000, scoped, tag = 'output window, operand 0, single buffered']
    %10 = vsyncpa [#allocation3], 0
    %11 = vsyncpa [#allocation6], 0
    %12 = vsyncpa [#allocation4], 0
    // Predicated region
    $region2: #{tpu_custom_call.1} parent=1 // pred_check
      _
    $region3: #{tpu_custom_call.1} parent=1 // pred_check_branch
      %14 = sbr.rel (0) target = $region5
    $region4: #{tpu_custom_call.1} parent=1 // pred_region
      %s16 = ssub.s32 128, 128
      %17 = vsyncadd [#allocation3], %s16
      %s18 = sshll.u32 [#allocation2], 4
      %s19 = int_to_ptr.vmem [resolvable:$true] %s18
      %24 = dma.hbm_to_vmem [thread:$0]  %s0, 128, %s19, [#allocation3], 64, 64, 4
    $region5: #{tpu_custom_call.1} parent=1 // pred_fallthru
      _
    // Predicated region
    $region6: #{tpu_custom_call.1} parent=1 // pred_check
      _
    $region7: #{tpu_custom_call.1} parent=1 // pred_check_branch
      %26 = sbr.rel (0) target = $region9
    $region8: #{tpu_custom_call.1} parent=1 // pred_region
      %s28 = ssub.s32 256, 256
      %29 = vsyncadd [#allocation6], %s28
      %s30 = sshll.u32 [#allocation5], 4
      %s31 = int_to_ptr.vmem [resolvable:$true] %s30
      %36 = dma.hbm_to_vmem [thread:$0]  %s1, 256, %s31, [#allocation6], 64, 64, 4
    $region9: #{tpu_custom_call.1} parent=1 // pred_fallthru
      _
    // Predicated region
    $region10: #{tpu_custom_call.1} parent=1 // pred_check
      _
    $region11: #{tpu_custom_call.1} parent=1 // pred_check_branch
      %38 = sbr.rel (0) target = $region13
    $region12: #{tpu_custom_call.1} parent=1 // pred_region
      _
    $region13: #{tpu_custom_call.1} parent=1 // pred_fallthru
      _
    // Predicated region
    $region14: #{tpu_custom_call.1} parent=1 // pred_check
      _
    $region15: #{tpu_custom_call.1} parent=1 // pred_check_branch
      %40 = sbr.rel (0) target = $region17
    $region16: #{tpu_custom_call.1} parent=1 // pred_region
      %s42 = ssub.s32 256, 256
      %43 = vsyncadd [#allocation6], %s42
      %s44 = sshll.u32 [#allocation7], 4
      %s45 = int_to_ptr.vmem [resolvable:$true] %s44
      %50 = dma.hbm_to_vmem [thread:$0]  %s3, 256, %s45, [#allocation6], 64, 64, 4
    $region17: #{tpu_custom_call.1} parent=1 // pred_fallthru
      _
    // Predicated region
    $region18: #{tpu_custom_call.1} parent=1 // pred_check
      _
    $region19: #{tpu_custom_call.1} parent=1 // pred_check_branch
      %52 = sbr.rel (0) target = $region21
    $region20: #{tpu_custom_call.1} parent=1 // pred_region
      _
    $region21: #{tpu_custom_call.1} parent=1 // pred_fallthru
      _
    // Predicated region
    $region22: #{tpu_custom_call.1} parent=1 // pred_check
      _
    $region23: #{tpu_custom_call.1} parent=1 // pred_check_branch
      %54 = sbr.rel (0) target = $region25
    $region24: #{tpu_custom_call.1} parent=1 // pred_region
      %55 = dma.done [#allocation3], 128
    $region25: #{tpu_custom_call.1} parent=1 // pred_fallthru
      _
    // Predicated region
    $region26: #{tpu_custom_call.1} parent=1 // pred_check
      _
    $region27: #{tpu_custom_call.1} parent=1 // pred_check_branch
      %57 = sbr.rel (0) target = $region29
    $region28: #{tpu_custom_call.1} parent=1 // pred_region
      %58 = dma.done [#allocation6], 256
    $region29: #{tpu_custom_call.1} parent=1 // pred_fallthru
      _
    // Predicated region
    $region30: #{tpu_custom_call.1} parent=1 // pred_check
      _
    $region31: #{tpu_custom_call.1} parent=1 // pred_check_branch
      %60 = sbr.rel (0) target = $region33
    $region32: #{tpu_custom_call.1} parent=1 // pred_region
      %61 = dma.done [#allocation6], 256
    $region33: #{tpu_custom_call.1} parent=1 // pred_fallthru
      _
    %v63 = vld [vmem:[%s2] sm:$0x1]
    %v64 = vld [vmem:[%s2 + $0x1] sm:$0x1]
    %v65 = vld [vmem:[%s2 + $0x2] sm:$0x1]
    %v66 = vld [vmem:[#allocation2] sm:$0xf]
    %v67 = vld [vmem:[#allocation2 + $0x4] sm:$0xf]
    %v68 = vld [vmem:[#allocation5] sm:$0xf]
    %v69 = vld [vmem:[#allocation5 + $0x4] sm:$0xf]
    %v70 = vld [vmem:[#allocation5 + $0x8] sm:$0xf]
    %v71 = vld [vmem:[#allocation5 + $0xc] sm:$0xf]
    %v72 = vlaneseq
    %v73 = vshrl.u32 %v72, 7
    %v74 = vsub.s32 0, %v73
    %v75 = vrot.slane %v63, %v74
    %v78 = vunpack.c.l.b16 %v66
    %v79 = vunpack.c.l.b16 %v67
    %v80 = vpack.c.b16 %v79, %v78
    %v85 = vunpack.c.l.b16 %v68
    %v86 = vunpack.c.l.b16 %v69
    %v87 = vunpack.c.l.b16 %v70
    %v88 = vunpack.c.l.b16 %v71
    %v89 = vpack.c.b16 %v86, %v85
    %v90 = vpack.c.b16 %v88, %v87
    %vm93 = vcmask 261120
    %v95 = vsel %vm93, %v80, 0
    %97 = vmatprep.subr.bf16.mxu0 0
    %98 = vmatpush1.bf16.msra.mxu0 %v89
    %99 = vmatprep.subr.bf16.mxu0 0
    %100 = vmatpush1.bf16.msra.mxu0 %v90
    %101 = vmatprep.subr.bf16.mxu0 0
    %102 = vmatpush1.bf16.msra.mxu0 0
    %103 = vmatprep.subr.bf16.mxu0 0
    %104 = vmatpush1.bf16.msra.mxu0 0
    %105 = vmatprep.subr.bf16.mxu0 0
    %106 = vmatpush1.bf16.msra.mxu0 0
    %107 = vmatprep.subr.bf16.mxu0 0
    %108 = vmatpush1.bf16.msra.mxu0 0
    %109 = vmatprep.subr.bf16.mxu0 0
    %110 = vmatpush1.bf16.msra.mxu0 0
    %111 = vmatprep.subr.bf16.mxu0 0
    %112 = vmatpush1.bf16.msra.mxu0 0
    %113 = vmatprep.subr.bf16.mxu0 0
    %114 = vmatpush1.bf16.msra.mxu0 0
    %115 = vmatprep.subr.bf16.mxu0 0
    %116 = vmatpush1.bf16.msra.mxu0 0
    %117 = vmatprep.subr.bf16.mxu0 0
    %118 = vmatpush1.bf16.msra.mxu0 0
    %119 = vmatprep.subr.bf16.mxu0 0
    %120 = vmatpush1.bf16.msra.mxu0 0
    %121 = vmatprep.subr.bf16.mxu0 0
    %122 = vmatpush1.bf16.msra.mxu0 0
    %123 = vmatprep.subr.bf16.mxu0 0
    %124 = vmatpush1.bf16.msra.mxu0 0
    %125 = vmatprep.subr.bf16.mxu0 0
    %126 = vmatpush1.bf16.msra.mxu0 0
    %127 = vmatprep.subr.bf16.mxu0 0
    %128 = vmatpush1.bf16.msra.mxu0 0
    %129 = vmatprep.mubr.bf16.mxu0 0
    %130 = vmatmul.mubr.bf16.gmra.mrb[0].mxu0 %v95
    %v131 = vpop.f32.mrb[0].mxu0
    %v132 = vadd.f32 %v75, %v131
    %v133 = vpop.f32.mrb[0].mxu0
    %v134 = vpop.f32.mrb[0].mxu0
    %v135 = vadd.f32 %v75, %v134
    %v136 = vpop.f32.mrb[0].mxu0
    %137 = vdwg.mxu0
    %v138 = vmul.f32 %v132, 0.5
    %v139 = vmul.f32 %v135, 0.5
    %v140 = vmul.f32 %v132, 0.70710677
    %v141 = vmul.f32 %v135, 0.70710677
    %v142 = verf.f32.pop %v140
    %v143 = verf.f32.pop %v141
    %v144 = vadd.f32 %v142, 1.0
    %v145 = vadd.f32 %v143, 1.0
    %v146 = vmul.f32 %v138, %v144
    %v147 = vmul.f32 %v139, %v145
    %v148 = vsel %vm93, %v146, 0.0
    %149 = vadd.xlane.f32.xlu0 %v148
    %v150 = vpop.xlane.xlu0 %149
    %v151 = vsel %vm93, %v147, 0.0
    %152 = vadd.xlane.f32.xlu0 %v151
    %v153 = vpop.xlane.xlu0 %152
    %v154 = vrcp.pop 32.0
    %v155 = vmul.f32 %v150, %v154
    %v156 = vmul.f32 %v153, %v154
    %v157 = vsub.f32 %v146, %v155
    %v158 = vsub.f32 %v147, %v156
    %v159 = vmul.f32 %v157, %v157
    %v160 = vmul.f32 %v158, %v158
    %v161 = vsel %vm93, %v159, 0.0
    %162 = vadd.xlane.f32.xlu0 %v161
    %v163 = vpop.xlane.xlu0 %162
    %v164 = vsel %vm93, %v160, 0.0
    %165 = vadd.xlane.f32.xlu0 %v164
    %v166 = vpop.xlane.xlu0 %165
    %v167 = vmul.f32 %v163, %v154
    %v168 = vmul.f32 %v166, %v154
    %v169 = vadd.f32 %v167, 1e-12
    %v170 = vadd.f32 %v168, 1e-12
    %v171 = vrsqrt.pop %v169
    %v172 = vrsqrt.pop %v170
    %v173 = vmul.f32 %v157, %v171
    %v174 = vmul.f32 %v158, %v172
    %v175 = vlaneseq
    %v176 = vshrl.u32 %v175, 7
    %v177 = vsub.s32 0, %v176
    %v178 = vrot.slane %v64, %v177
    %v179 = vmul.f32 %v173, %v178
    %v180 = vmul.f32 %v174, %v178
    %v181 = vlaneseq
    %v182 = vshrl.u32 %v181, 7
    %v183 = vsub.s32 0, %v182
    %v184 = vrot.slane %v65, %v183
    %v185 = vadd.f32 %v179, %v184
    %v186 = vadd.f32 %v180, %v184
    %v187 = vpack.c.bf16 %v186, %v185
    %v188 = vld [vmem:[#allocation7] sm:$0xf]
    %v189 = vld [vmem:[#allocation7 + $0x4] sm:$0xf]
    %v190 = vld [vmem:[#allocation7 + $0x8] sm:$0xf]
    %v191 = vld [vmem:[#allocation7 + $0xc] sm:$0xf]
    %v192 = vld [vmem:[%s4] sm:$0x1]
    %v194 = vlaneseq
    %v195 = vshrl.u32 %v194, 7
    %v196 = vsub.s32 0, %v195
    %v197 = vrot.slane %v192, %v196
    %v203 = vunpack.c.l.b16 %v188
    %v204 = vunpack.c.l.b16 %v189
    %v205 = vunpack.c.l.b16 %v190
    %v206 = vunpack.c.l.b16 %v191
    %v207 = vpack.c.b16 %v204, %v203
    %v208 = vpack.c.b16 %v206, %v205
    %v212 = vsel %vm93, %v187, 0
    %214 = vmatprep.subr.bf16.mxu0 0
    %215 = vmatpush1.bf16.msra.mxu0 %v207
    %216 = vmatprep.subr.bf16.mxu0 0
    %217 = vmatpush1.bf16.msra.mxu0 %v208
    %218 = vmatprep.subr.bf16.mxu0 0
    %219 = vmatpush1.bf16.msra.mxu0 0
    %220 = vmatprep.subr.bf16.mxu0 0
    %221 = vmatpush1.bf16.msra.mxu0 0
    %222 = vmatprep.subr.bf16.mxu0 0
    %223 = vmatpush1.bf16.msra.mxu0 0
    %224 = vmatprep.subr.bf16.mxu0 0
    %225 = vmatpush1.bf16.msra.mxu0 0
    %226 = vmatprep.subr.bf16.mxu0 0
    %227 = vmatpush1.bf16.msra.mxu0 0
    %228 = vmatprep.subr.bf16.mxu0 0
    %229 = vmatpush1.bf16.msra.mxu0 0
    %230 = vmatprep.subr.bf16.mxu0 0
    %231 = vmatpush1.bf16.msra.mxu0 0
    %232 = vmatprep.subr.bf16.mxu0 0
    %233 = vmatpush1.bf16.msra.mxu0 0
    %234 = vmatprep.subr.bf16.mxu0 0
    %235 = vmatpush1.bf16.msra.mxu0 0
    %236 = vmatprep.subr.bf16.mxu0 0
    %237 = vmatpush1.bf16.msra.mxu0 0
    %238 = vmatprep.subr.bf16.mxu0 0
    %239 = vmatpush1.bf16.msra.mxu0 0
    %240 = vmatprep.subr.bf16.mxu0 0
    %241 = vmatpush1.bf16.msra.mxu0 0
    %242 = vmatprep.subr.bf16.mxu0 0
    %243 = vmatpush1.bf16.msra.mxu0 0
    %244 = vmatprep.subr.bf16.mxu0 0
    %245 = vmatpush1.bf16.msra.mxu0 0
    %246 = vmatprep.mubr.bf16.mxu0 0
    %247 = vmatmul.mubr.bf16.gmra.mrb[0].mxu0 %v212
    %v248 = vpop.f32.mrb[0].mxu0
    %v249 = vadd.f32 %v197, %v248
    %v250 = vpop.f32.mrb[0].mxu0
    %v251 = vpop.f32.mrb[0].mxu0
    %v252 = vadd.f32 %v197, %v251
    %v253 = vpop.f32.mrb[0].mxu0
    %254 = vdwg.mxu0
    %255 = vst [vmem:[#allocation8] sm:$0xff] %v249
    %256 = vst [vmem:[#allocation8 + $0x8] sm:$0xff] %v252
    // Predicated region
    $region34: #{tpu_custom_call.1} parent=1 // pred_check
      _
    $region35: #{tpu_custom_call.1} parent=1 // pred_check_branch
      %258 = sbr.rel (0) target = $region37
    $region36: #{tpu_custom_call.1} parent=1 // pred_region
      %s260 = ssub.s32 256, 256
      %261 = vsyncadd [#allocation4], %s260
      %s262 = sshll.u32 [#allocation8], 4
      %s263 = int_to_ptr.vmem [resolvable:$true] %s262
      %268 = dma.vmem_to_hbm [thread:$0]  %s263, 256, %s5, [#allocation4], 128, 128, 8
    $region37: #{tpu_custom_call.1} parent=1 // pred_fallthru
      _
    // Predicated region
    $region38: #{tpu_custom_call.1} parent=1 // pred_check
      _
    $region39: #{tpu_custom_call.1} parent=1 // pred_check_branch
      %270 = sbr.rel (0) target = $region41
    $region40: #{tpu_custom_call.1} parent=1 // pred_region
      %271 = dma.done [#allocation4], 256
    $region41: #{tpu_custom_call.1} parent=1 // pred_fallthru
      _
    %272 = vsyncpa [#allocation3], 1
    %273 = vsyncpa [#allocation6], 1
    %274 = vsyncpa [#allocation4], 1

// kernel: tpu_custom_call.1
$region0: #{tpu_custom_call.1}
  #allocation0 [shape = 'u32[]', space=smem, size = 0x4, offset = 0x4, fixed_abs, tag = 'smem constant byte address 0x4 - core index']
  #allocation1 [shape = 'u32[144,128]{1,0:T(1,128)}', space=vmem, size = 0x12000, scoped, tag = 'internal scratch']
  %s0 = inlined_call_operand.hbm [shape: bf16[16,32], index: 0, kind: input, shape index: {}]
  %s1 = inlined_call_operand.hbm [shape: bf16[32,32], index: 1, kind: input, shape index: {}]
  %s2 = inlined_call_operand.vmem [shape: f32[3,32], index: 2, kind: input, shape index: {}]
  %s3 = inlined_call_operand.hbm [shape: bf16[32,128], index: 3, kind: input, shape index: {}]
  %s4 = inlined_call_operand.vmem [shape: f32[1,128], index: 4, kind: input, shape index: {}]
  %s5 = inlined_call_operand.hbm [shape: f32[16,128], index: 5, kind: output, shape index: {}]
  %s6 = sld [smem:[#allocation0]]
  $region42: #{tpu_custom_call.1} parent=0
    _
  %s8 = ssub.s32 1, %s6
  %s9 = scalar_select 0, %s8, %s6
  $region1: #{tpu_custom_call.1} parent=0
    #allocation2 [shape = 'u8[4096]{0}', space=vmem, size = 0x1000, scoped, tag = 'input window, operand 0, single buffered']
    #allocation3 [shape = 's32[1]{0}', space=sflag, size = 0x4, scoped, tag = 'scoped memory for tpu_custom_call.1']
    #allocation4 [shape = 's32[1]{0}', space=sflag, size = 0x4, scoped, tag = 'scoped memory for tpu_custom_call.1']
    #allocation5 [shape = 'u8[8192]{0}', space=vmem, size = 0x2000, scoped, tag = 'input window, operand 1, single buffered']
    #allocation6 [shape = 's32[1]{0}', space=sflag, size = 0x4, scoped, tag = 'scoped memory for tpu_custom_call.1']
    #allocation7 [shape = 'u8[8192]{0}', space=vmem, size = 0x2000, scoped, tag = 'input window, operand 3, single buffered']
    #allocation8 [shape = 'u8[8192]{0}', space=vmem, size = 0x2000, scoped, tag = 'output window, operand 0, single buffered']
    %10 = vsyncpa [#allocation3], 0
    %11 = vsyncpa [#allocation6], 0
    %12 = vsyncpa [#allocation4], 0
    // Predicated region
    $region2: #{tpu_custom_call.1} parent=1 // pred_check
      _
    $region3: #{tpu_custom_call.1} parent=1 // pred_check_branch
      %14 = sbr.rel (0) target = $region5
    $region4: #{tpu_custom_call.1} parent=1 // pred_region
      %s16 = ssub.s32 128, 128
      %17 = vsyncadd [#allocation3], %s16
      %s18 = sshll.u32 [#allocation2], 4
      %s19 = int_to_ptr.vmem [resolvable:$true] %s18
      %24 = dma.hbm_to_vmem [thread:$0]  %s0, 128, %s19, [#allocation3], 64, 64, 4
    $region5: #{tpu_custom_call.1} parent=1 // pred_fallthru
      _
    // Predicated region
    $region6: #{tpu_custom_call.1} parent=1 // pred_check
      _
    $region7: #{tpu_custom_call.1} parent=1 // pred_check_branch
      %26 = sbr.rel (0) target = $region9
    $region8: #{tpu_custom_call.1} parent=1 // pred_region
      %s28 = ssub.s32 256, 256
      %29 = vsyncadd [#allocation6], %s28
      %s30 = sshll.u32 [#allocation5], 4
      %s31 = int_to_ptr.vmem [resolvable:$true] %s30
      %36 = dma.hbm_to_vmem [thread:$0]  %s1, 256, %s31, [#allocation6], 64, 64, 4
    $region9: #{tpu_custom_call.1} parent=1 // pred_fallthru
      _
    // Predicated region
    $region10: #{tpu_custom_call.1} parent=1 // pred_check
      _
    $region11: #{tpu_custom_call.1} parent=1 // pred_check_branch
      %38 = sbr.rel (0) target = $region13
    $region12: #{tpu_custom_call.1} parent=1 // pred_region
      _
    $region13: #{tpu_custom_call.1} parent=1 // pred_fallthru
      _
    // Predicated region
    $region14: #{tpu_custom_call.1} parent=1 // pred_check
      _
    $region15: #{tpu_custom_call.1} parent=1 // pred_check_branch
      %40 = sbr.rel (0) target = $region17
    $region16: #{tpu_custom_call.1} parent=1 // pred_region
      %s42 = ssub.s32 256, 256
      %43 = vsyncadd [#allocation6], %s42
      %s44 = sshll.u32 [#allocation7], 4
      %s45 = int_to_ptr.vmem [resolvable:$true] %s44
      %50 = dma.hbm_to_vmem [thread:$0]  %s3, 256, %s45, [#allocation6], 64, 64, 4
    $region17: #{tpu_custom_call.1} parent=1 // pred_fallthru
      _
    // Predicated region
    $region18: #{tpu_custom_call.1} parent=1 // pred_check
      _
    $region19: #{tpu_custom_call.1} parent=1 // pred_check_branch
      %52 = sbr.rel (0) target = $region21
    $region20: #{tpu_custom_call.1} parent=1 // pred_region
      _
    $region21: #{tpu_custom_call.1} parent=1 // pred_fallthru
      _
    // Predicated region
    $region22: #{tpu_custom_call.1} parent=1 // pred_check
      _
    $region23: #{tpu_custom_call.1} parent=1 // pred_check_branch
      %54 = sbr.rel (0) target = $region25
    $region24: #{tpu_custom_call.1} parent=1 // pred_region
      %55 = dma.done [#allocation3], 128
    $region25: #{tpu_custom_call.1} parent=1 // pred_fallthru
      _
    // Predicated region
    $region26: #{tpu_custom_call.1} parent=1 // pred_check
      _
    $region27: #{tpu_custom_call.1} parent=1 // pred_check_branch
      %57 = sbr.rel (0) target = $region29
    $region28: #{tpu_custom_call.1} parent=1 // pred_region
      %58 = dma.done [#allocation6], 256
    $region29: #{tpu_custom_call.1} parent=1 // pred_fallthru
      _
    // Predicated region
    $region30: #{tpu_custom_call.1} parent=1 // pred_check
      _
    $region31: #{tpu_custom_call.1} parent=1 // pred_check_branch
      %60 = sbr.rel (0) target = $region33
    $region32: #{tpu_custom_call.1} parent=1 // pred_region
      %61 = dma.done [#allocation6], 256
    $region33: #{tpu_custom_call.1} parent=1 // pred_fallthru
      _
    %v63 = vld [vmem:[%s2] sm:$0x1]
    %v64 = vld [vmem:[%s2 + $0x1] sm:$0x1]
    %v65 = vld [vmem:[%s2 + $0x2] sm:$0x1]
    %v66 = vld [vmem:[#allocation2] sm:$0xf]
    %v67 = vld [vmem:[#allocation2 + $0x4] sm:$0xf]
    %v68 = vld [vmem:[#allocation5] sm:$0xf]
    %v69 = vld [vmem:[#allocation5 + $0x4] sm:$0xf]
    %v70 = vld [vmem:[#allocation5 + $0x8] sm:$0xf]
    %v71 = vld [vmem:[#allocation5 + $0xc] sm:$0xf]
    %v72 = vlaneseq
    %v73 = vshrl.u32 %v72, 7
    %v74 = vsub.s32 0, %v73
    %v75 = vrot.slane %v63, %v74
    %v78 = vunpack.c.l.b16 %v66
    %v79 = vunpack.c.l.b16 %v67
    %v80 = vpack.c.b16 %v79, %v78
    %v85 = vunpack.c.l.b16 %v68
    %v86 = vunpack.c.l.b16 %v69
    %v87 = vunpack.c.l.b16 %v70
    %v88 = vunpack.c.l.b16 %v71
    %v89 = vpack.c.b16 %v86, %v85
    %v90 = vpack.c.b16 %v88, %v87
    %vm93 = vcmask 261120
    %v95 = vsel %vm93, %v80, 0
    %97 = vmatprep.subr.bf16.mxu0 0
    %98 = vmatpush1.bf16.msra.mxu0 %v89
    %99 = vmatprep.subr.bf16.mxu0 0
    %100 = vmatpush1.bf16.msra.mxu0 %v90
    %101 = vmatprep.subr.bf16.mxu0 0
    %102 = vmatpush1.bf16.msra.mxu0 0
    %103 = vmatprep.subr.bf16.mxu0 0
    %104 = vmatpush1.bf16.msra.mxu0 0
    %105 = vmatprep.subr.bf16.mxu0 0
    %106 = vmatpush1.bf16.msra.mxu0 0
    %107 = vmatprep.subr.bf16.mxu0 0
    %108 = vmatpush1.bf16.msra.mxu0 0
    %109 = vmatprep.subr.bf16.mxu0 0
    %110 = vmatpush1.bf16.msra.mxu0 0
    %111 = vmatprep.subr.bf16.mxu0 0
    %112 = vmatpush1.bf16.msra.mxu0 0
    %113 = vmatprep.subr.bf16.mxu0 0
    %114 = vmatpush1.bf16.msra.mxu0 0
    %115 = vmatprep.subr.bf16.mxu0 0
    %116 = vmatpush1.bf16.msra.mxu0 0
    %117 = vmatprep.subr.bf16.mxu0 0
    %118 = vmatpush1.bf16.msra.mxu0 0
    %119 = vmatprep.subr.bf16.mxu0 0
    %120 = vmatpush1.bf16.msra.mxu0 0
    %121 = vmatprep.subr.bf16.mxu0 0
    %122 = vmatpush1.bf16.msra.mxu0 0
    %123 = vmatprep.subr.bf16.mxu0 0
    %124 = vmatpush1.bf16.msra.mxu0 0
    %125 = vmatprep.subr.bf16.mxu0 0
    %126 = vmatpush1.bf16.msra.mxu0 0
    %127 = vmatprep.subr.bf16.mxu0 0
    %128 = vmatpush1.bf16.msra.mxu0 0
    %129 = vmatprep.mubr.bf16.mxu0 0
    %130 = vmatmul.mubr.bf16.gmra.mrb[0].mxu0 %v95
    %v131 = vpop.f32.mrb[0].mxu0
    %v132 = vadd.f32 %v75, %v131
    %v133 = vpop.f32.mrb[0].mxu0
    %v134 = vpop.f32.mrb[0].mxu0
    %v135 = vadd.f32 %v75, %v134
    %v136 = vpop.f32.mrb[0].mxu0
    %137 = vdwg.mxu0
    %v138 = vmul.f32 %v132, 0.5
    %v139 = vmul.f32 %v135, 0.5
    %v140 = vmul.f32 %v132, 0.70710677
    %v141 = vmul.f32 %v135, 0.70710677
    %v142 = verf.f32.pop %v140
    %v143 = verf.f32.pop %v141
    %v144 = vadd.f32 %v142, 1.0
    %v145 = vadd.f32 %v143, 1.0
    %v146 = vmul.f32 %v138, %v144
    %v147 = vmul.f32 %v139, %v145
    %v148 = vsel %vm93, %v146, 0.0
    %149 = vadd.xlane.f32.xlu0 %v148
    %v150 = vpop.xlane.xlu0 %149
    %v151 = vsel %vm93, %v147, 0.0
    %152 = vadd.xlane.f32.xlu0 %v151
    %v153 = vpop.xlane.xlu0 %152
    %v154 = vrcp.pop 32.0
    %v155 = vmul.f32 %v150, %v154
    %v156 = vmul.f32 %v153, %v154
    %v157 = vsub.f32 %v146, %v155
    %v158 = vsub.f32 %v147, %v156
    %v159 = vmul.f32 %v157, %v157
    %v160 = vmul.f32 %v158, %v158
    %v161 = vsel %vm93, %v159, 0.0
    %162 = vadd.xlane.f32.xlu0 %v161
    %v163 = vpop.xlane.xlu0 %162
    %v164 = vsel %vm93, %v160, 0.0
    %165 = vadd.xlane.f32.xlu0 %v164
    %v166 = vpop.xlane.xlu0 %165
    %v167 = vmul.f32 %v163, %v154
    %v168 = vmul.f32 %v166, %v154
    %v169 = vadd.f32 %v167, 1e-12
    %v170 = vadd.f32 %v168, 1e-12
    %v171 = vrsqrt.pop %v169
    %v172 = vrsqrt.pop %v170
    %v173 = vmul.f32 %v157, %v171
    %v174 = vmul.f32 %v158, %v172
    %v175 = vlaneseq
    %v176 = vshrl.u32 %v175, 7
    %v177 = vsub.s32 0, %v176
    %v178 = vrot.slane %v64, %v177
    %v179 = vmul.f32 %v173, %v178
    %v180 = vmul.f32 %v174, %v178
    %v181 = vlaneseq
    %v182 = vshrl.u32 %v181, 7
    %v183 = vsub.s32 0, %v182
    %v184 = vrot.slane %v65, %v183
    %v185 = vadd.f32 %v179, %v184
    %v186 = vadd.f32 %v180, %v184
    %v187 = vpack.c.bf16 %v186, %v185
    %v188 = vld [vmem:[#allocation7] sm:$0xf]
    %v189 = vld [vmem:[#allocation7 + $0x4] sm:$0xf]
    %v190 = vld [vmem:[#allocation7 + $0x8] sm:$0xf]
    %v191 = vld [vmem:[#allocation7 + $0xc] sm:$0xf]
    %v192 = vld [vmem:[%s4] sm:$0x1]
    %v194 = vlaneseq
    %v195 = vshrl.u32 %v194, 7
    %v196 = vsub.s32 0, %v195
    %v197 = vrot.slane %v192, %v196
    %v203 = vunpack.c.l.b16 %v188
    %v204 = vunpack.c.l.b16 %v189
    %v205 = vunpack.c.l.b16 %v190
    %v206 = vunpack.c.l.b16 %v191
    %v207 = vpack.c.b16 %v204, %v203
    %v208 = vpack.c.b16 %v206, %v205
    %v212 = vsel %vm93, %v187, 0
    %214 = vmatprep.subr.bf16.mxu0 0
    %215 = vmatpush1.bf16.msra.mxu0 %v207
    %216 = vmatprep.subr.bf16.mxu0 0
    %217 = vmatpush1.bf16.msra.mxu0 %v208
    %218 = vmatprep.subr.bf16.mxu0 0
    %219 = vmatpush1.bf16.msra.mxu0 0
    %220 = vmatprep.subr.bf16.mxu0 0
    %221 = vmatpush1.bf16.msra.mxu0 0
    %222 = vmatprep.subr.bf16.mxu0 0
    %223 = vmatpush1.bf16.msra.mxu0 0
    %224 = vmatprep.subr.bf16.mxu0 0
    %225 = vmatpush1.bf16.msra.mxu0 0
    %226 = vmatprep.subr.bf16.mxu0 0
    %227 = vmatpush1.bf16.msra.mxu0 0
    %228 = vmatprep.subr.bf16.mxu0 0
    %229 = vmatpush1.bf16.msra.mxu0 0
    %230 = vmatprep.subr.bf16.mxu0 0
    %231 = vmatpush1.bf16.msra.mxu0 0
    %232 = vmatprep.subr.bf16.mxu0 0
    %233 = vmatpush1.bf16.msra.mxu0 0
    %234 = vmatprep.subr.bf16.mxu0 0
    %235 = vmatpush1.bf16.msra.mxu0 0
    %236 = vmatprep.subr.bf16.mxu0 0
    %237 = vmatpush1.bf16.msra.mxu0 0
    %238 = vmatprep.subr.bf16.mxu0 0
    %239 = vmatpush1.bf16.msra.mxu0 0
    %240 = vmatprep.subr.bf16.mxu0 0
    %241 = vmatpush1.bf16.msra.mxu0 0
    %242 = vmatprep.subr.bf16.mxu0 0
    %243 = vmatpush1.bf16.msra.mxu0 0
    %244 = vmatprep.subr.bf16.mxu0 0
    %245 = vmatpush1.bf16.msra.mxu0 0
    %246 = vmatprep.mubr.bf16.mxu0 0
    %247 = vmatmul.mubr.bf16.gmra.mrb[0].mxu0 %v212
    %v248 = vpop.f32.mrb[0].mxu0
    %v249 = vadd.f32 %v197, %v248
    %v250 = vpop.f32.mrb[0].mxu0
    %v251 = vpop.f32.mrb[0].mxu0
    %v252 = vadd.f32 %v197, %v251
    %v253 = vpop.f32.mrb[0].mxu0
    %254 = vdwg.mxu0
    %255 = vst [vmem:[#allocation8] sm:$0xff] %v249
    %256 = vst [vmem:[#allocation8 + $0x8] sm:$0xff] %v252
    // Predicated region
    $region34: #{tpu_custom_call.1} parent=1 // pred_check
      _
    $region35: #{tpu_custom_call.1} parent=1 // pred_check_branch
      %258 = sbr.rel (0) target = $region37
    $region36: #{tpu_custom_call.1} parent=1 // pred_region
      %s260 = ssub.s32 256, 256
      %261 = vsyncadd [#allocation4], %s260
      %s262 = sshll.u32 [#allocation8], 4
      %s263 = int_to_ptr.vmem [resolvable:$true] %s262
      %268 = dma.vmem_to_hbm [thread:$0]  %s263, 256, %s5, [#allocation4], 128, 128, 8
    $region37: #{tpu_custom_call.1} parent=1 // pred_fallthru
      _
    // Predicated region
    $region38: #{tpu_custom_call.1} parent=1 // pred_check
      _
    $region39: #{tpu_custom_call.1} parent=1 // pred_check_branch
      %270 = sbr.rel (0) target = $region41
    $region40: #{tpu_custom_call.1} parent=1 // pred_region
      %271 = dma.done [#allocation4], 256
    $region41: #{tpu_custom_call.1} parent=1 // pred_fallthru
      _
    %272 = vsyncpa [#allocation3], 1
    %273 = vsyncpa [#allocation6], 1
    %274 = vsyncpa [#allocation4], 1

</llo_original>
